<compile_context>
chip_gen: v6e
topology: v6e:2x2x1
jax: 0.10.0
libtpu: 0.0.40
codegen_flags: <defaults>
</compile_context>

<pallas_src>
import jax
import jax.numpy as jnp
import numpy as np
from jax.experimental import pallas as pl
from jax.experimental.pallas import tpu as pltpu

LANE = 128
N_ALIGN = 256        # row/col alignment of the padded graph (MXU-friendly)
TILE_DEFAULT = 1024  # aggregation tile (multiple of 256, <= 2048 for v7x VMEM)


# --------------------------- fused GCN kernel --------------------------------
def gcn_fused_kernel(a_ref, x_ref, w_ref, b_ref, o_ref):
    """out[i] = relu( sum_k A[i,k] @ (x[k] @ W^T) + b ).

    a_ref : (tm, tk)      bf16   A_norm tile (streamed from HBM)
    x_ref : (n_pad, F_in) bf16   node features, VMEM-resident (constant index)
    w_ref : (F_in, F_pad) bf16   W^T, VMEM-resident
    b_ref : (1, F_pad)    f32    bias, VMEM-resident
    o_ref : (tm, F_pad)   f32    output block, resident across k (accumulator)
    """
    k = pl.program_id(1)

    @pl.when(k == 0)
    def _():
        o_ref[...] = jnp.zeros_like(o_ref)

    tk = a_ref.shape[1]
    start = pl.multiple_of(k * tk, tk)
    x_blk = x_ref[pl.ds(start, tk), :]                       # (tk, F_in) bf16

    # tiny matmul: xw_k = x_k @ W^T  (bf16 x bf16 -> f32 accumulate)
    xw_k = jnp.dot(x_blk, w_ref[...], preferred_element_type=jnp.float32)

    # dominant matmul: accumulate A_ik @ xw_k directly into the output block
    o_ref[...] += jnp.dot(a_ref[...], xw_k.astype(jnp.bfloat16),
                          preferred_element_type=jnp.float32)

    @pl.when(k == pl.num_programs(1) - 1)
    def _():
        o_ref[...] = jnp.maximum(o_ref[...] + b_ref[...], 0.0)


# ------------------------------ layer wrapper --------------------------------
def _round_up(v, m):
    return ((v + m - 1) // m) * m


def gcn_layer_pallas(a_norm, x, weight, bias, *, tile=TILE_DEFAULT):
    """out = relu(A_norm @ x @ W.T + b), fused in a single Pallas kernel.

    a_norm: (n_a, n_a) with n_a >= N; preferably bf16 and pre-padded to a
            multiple of 256 (as produced by build_norm_adjacency) so no O(N^2)
            cast/pad pass runs here.
    """
    n, f_in = x.shape
    f_out = weight.shape[0]
    f_pad = _round_up(f_out, LANE)

    # ---- tile selection: multiple of 256 (v6e/v7x MXU), capped for v7x VMEM.
    tile = max(N_ALIGN, min((int(tile) // N_ALIGN) * N_ALIGN, 2048))
    n_pad = _round_up(max(n, a_norm.shape[0]), N_ALIGN)
    tm = min(tile, n_pad)
    while n_pad % tm:
        tm -= N_ALIGN
    tk = tm

    # ---- operand prep (cheap O(N*F) passes; A pad/cast only as a fallback).
    if a_norm.shape[0] != n_pad or a_norm.dtype != jnp.bfloat16:
        a_p = jnp.zeros((n_pad, n_pad), jnp.bfloat16)
        a_p = a_p.at[: a_norm.shape[0], : a_norm.shape[1]].set(
            a_norm.astype(jnp.bfloat16))
    else:
        a_p = a_norm
    x_p = jnp.zeros((n_pad, f_in), jnp.bfloat16).at[:n].set(
        x.astype(jnp.bfloat16))
    w_t = jnp.zeros((f_in, f_pad), jnp.bfloat16).at[:, :f_out].set(
        weight.T.astype(jnp.bfloat16))
    b_p = jnp.zeros((1, f_pad), jnp.float32).at[:, :f_out].set(
        bias.reshape(1, f_out).astype(jnp.float32))

    # ---- VMEM budget (double-buffered streams + resident operands) + headroom
    vmem_needed = (
        2 * tm * tk * 2          # A tile, double-buffered, bf16
        + 2 * tm * f_pad * 4     # output block, double-buffered, f32
        + 2 * n_pad * f_in * 2   # resident x (allow 2 bufs)
        + 2 * f_in * f_pad * 2   # resident W^T
        + 2 * f_pad * 4          # resident bias
    )
    vmem_limit = int(min(max(vmem_needed + (4 << 20), 16 << 20), 64 << 20))

    out_pad = pl.pallas_call(
        gcn_fused_kernel,
        out_shape=jax.ShapeDtypeStruct((n_pad, f_pad), jnp.float32),
        grid_spec=pltpu.PrefetchScalarGridSpec(
            num_scalar_prefetch=0,
            grid=(n_pad // tm, n_pad // tk),
            in_specs=[
                pl.BlockSpec((tm, tk), lambda i, k: (i, k)),       # A tile
                pl.BlockSpec((n_pad, f_in), lambda i, k: (0, 0)),  # x resident
                pl.BlockSpec((f_in, f_pad), lambda i, k: (0, 0)),  # W^T resident
                pl.BlockSpec((1, f_pad), lambda i, k: (0, 0)),     # bias
            ],
            out_specs=pl.BlockSpec((tm, f_pad), lambda i, k: (i, 0)),
        ),
        compiler_params=pltpu.CompilerParams(
            dimension_semantics=("parallel", "arbitrary"),
            vmem_limit_bytes=vmem_limit),
    )(a_p, x_p, w_t, b_p)

    return out_pad[:n, :f_out]


# ------------------------- adjacency construction ----------------------------
def build_norm_adjacency(edge_index, num_nodes, pad_to=None,
                         dtype=jnp.bfloat16):
    """add_remaining_self_loops + symmetric GCN normalization -> dense A_norm.

    Emits the matrix already padded to `pad_to` rows/cols and in `dtype`
    (bf16 by default) so the per-layer kernel streams it directly with no
    extra O(N^2) cast/pad passes. Padded rows/cols are zero (harmless).
    """
    n_pad = num_nodes if pad_to is None else max(int(pad_to), num_nodes)
    row, col = edge_index[0], edge_index[1]
    # add_remaining_self_loops: keep non-self-loop edges, add one self loop per
    # node. Removed self-loop duplicates are routed to (0,0) with weight 0.
    keep = row != col
    row = jnp.concatenate([jnp.where(keep, row, 0), jnp.arange(num_nodes)])
    col = jnp.concatenate([jnp.where(keep, col, 0), jnp.arange(num_nodes)])
    w = jnp.concatenate(
        [keep.astype(jnp.float32), jnp.ones((num_nodes,), jnp.float32)])
    deg = jnp.zeros((num_nodes,), jnp.float32).at[row].add(w)
    deg_inv_sqrt = jnp.where(deg > 0, deg ** -0.5, 0.0)
    norm = deg_inv_sqrt[row] * deg_inv_sqrt[col] * w
    # scatter_add of norm * x[col] into row  ==  A_norm @ x  (f32 accumulation,
    # single cast to the streaming dtype at the producer).
    a = jnp.zeros((n_pad, n_pad), jnp.float32).at[row, col].add(norm)
    return a.astype(dtype)


def glorot(key, shape):
    fan_out, fan_in = shape
    limit = np.sqrt(6.0 / (fan_in + fan_out))
    return jax.random.uniform(key, shape, jnp.float32, -limit, limit)


if __name__ == "__main__":
    key = jax.random.PRNGKey(0)
    k_x, k_e1, k_e2, k_w = jax.random.split(key, 4)

    N, E, F_IN, F_OUT = 256, 1024, 32, 16

    # node features [N, F_in]
    x = jax.random.normal(k_x, (N, F_IN), jnp.float32)

    # random edge_index [2, E] (no self loops; forward adds them)
    src = jax.random.randint(k_e1, (E,), 0, N, jnp.int32)
    dst = jax.random.randint(k_e2, (E,), 0, N, jnp.int32)
    dst = jnp.where(dst == src, (dst + 1) % N, dst)
    edge_index = jnp.stack([src, dst])

    # Linear(in_dim, out_dim): weight [F_out, F_in] glorot, bias zeros
    weight = glorot(k_w, (F_OUT, F_IN))
    bias = jnp.zeros((F_OUT,), jnp.float32)

    # bf16, 256-aligned adjacency built once at the producer
    a_bf16 = build_norm_adjacency(edge_index, N, pad_to=_round_up(N, N_ALIGN))

    out = gcn_layer_pallas(a_bf16, x, weight, bias)
    out = jax.block_until_ready(out)
    assert out.shape == (N, F_OUT)

    # --- tight check: replicate the kernel's bf16-quantized operand path -----
    # (tolerance leaves room for MXU-vs-BLAS f32 summation-order differences
    #  and rare bf16 rounding-boundary flips on the xw intermediate)
    F_PAD = _round_up(F_OUT, LANE)
    a_q = np.asarray(a_bf16.astype(jnp.float32))[:N, :N]
    x_q = np.asarray(x.astype(jnp.bfloat16).astype(jnp.float32))
    w_q = np.zeros((F_IN, F_PAD), np.float32)
    w_q[:, :F_OUT] = np.asarray(weight.T.astype(jnp.bfloat16).astype(jnp.float32))
    b_q = np.zeros((1, F_PAD), np.float32)
    b_q[:, :F_OUT] = np.asarray(bias, dtype=np.float32)
    xw = x_q @ w_q
    xw_q = np.asarray(jnp.asarray(xw).astype(jnp.bfloat16).astype(jnp.float32))
    ref_tight = np.maximum(a_q @ xw_q + b_q, 0.0)[:, :F_OUT]
    np.testing.assert_allclose(np.asarray(out), ref_tight, rtol=2e-3, atol=2e-3)

    # --- loose check against the full-f32 reference semantics ----------------
    a_f32 = np.asarray(
        build_norm_adjacency(edge_index, N, pad_to=N, dtype=jnp.float32))
    ref_f32 = np.maximum(
        (a_f32 @ np.asarray(x)) @ np.asarray(weight).T + np.asarray(bias), 0.0)
    np.testing.assert_allclose(np.asarray(out), ref_f32, rtol=3e-2, atol=3e-2)

    print("KERNEL_OK")
</pallas_src>

<mosaic_0001>
module attributes {stable_mosaic.version = 11 : i64} {
  func.func @gcn_fused_kernel(%arg0: i32, %arg1: i32, %arg2: memref<256x256xbf16, #tpu.memory_space<vmem>>, %arg3: memref<256x32xbf16, #tpu.memory_space<vmem>>, %arg4: memref<32x128xbf16, #tpu.memory_space<vmem>>, %arg5: memref<1x128xf32, #tpu.memory_space<vmem>>, %arg6: memref<256x128xf32, #tpu.memory_space<vmem>>) attributes {dimension_semantics = [#tpu.dimension_semantics<parallel>, #tpu.dimension_semantics<arbitrary>], iteration_bounds = array<i64: 1, 1>, scalar_prefetch = 0 : i64, scratch_operands = 0 : i64, tpu.core_type = #tpu.core_type<tc>, window_params = [{transform_indices = @transform_0, window_bounds = array<i64: 256, 256>}, {pipeline_mode = #tpu.pipeline_mode<synchronous>, transform_indices = @transform_1, window_bounds = array<i64: 256, 32>}, {pipeline_mode = #tpu.pipeline_mode<synchronous>, transform_indices = @transform_2, window_bounds = array<i64: 32, 128>}, {pipeline_mode = #tpu.pipeline_mode<synchronous>, transform_indices = @transform_3, window_bounds = array<i64: 1, 128>}, {transform_indices = @transform_4, window_bounds = array<i64: 256, 128>}]} {
    %c0_i32 = arith.constant 0 : i32
    %0 = arith.cmpi eq, %arg1, %c0_i32 : i32
    %1 = arith.extui %0 : i1 to i32
    %c0_i32_0 = arith.constant 0 : i32
    %2 = arith.cmpi ne, %1, %c0_i32_0 : i32
    scf.if %2 {
      %cst_12 = arith.constant 0.000000e+00 : f32
      %18 = vector.broadcast %cst_12 : f32 to vector<256x128xf32>
      %c0_13 = arith.constant 0 : index
      %c0_14 = arith.constant 0 : index
      %19 = vector.load %arg6[%c0_13, %c0_14] : memref<256x128xf32, #tpu.memory_space<vmem>>, vector<256x128xf32>
      tpu.vector_store %arg6[%c0_13, %c0_14], %18 {strides = array<i32>} : memref<256x128xf32, #tpu.memory_space<vmem>>, vector<256x128xf32>,
    } else {
    }
    %c256_i32 = arith.constant 256 : i32
    %3 = arith.muli %arg1, %c256_i32 : i32
    %4 = tpu.assume_multiple %3, 256 : i32
    %5 = arith.index_cast %4 : i32 to index
    %c0 = arith.constant 0 : index
    %6 = vector.load %arg3[%5, %c0] : memref<256x32xbf16, #tpu.memory_space<vmem>>, vector<256x32xbf16>
    %c0_1 = arith.constant 0 : index
    %c0_2 = arith.constant 0 : index
    %7 = vector.load %arg4[%c0_1, %c0_2] : memref<32x128xbf16, #tpu.memory_space<vmem>>, vector<32x128xbf16>
    %cst = arith.constant dense<0.000000e+00> : vector<256x128xf32>
    %8 = tpu.matmul %6, %7, %cst {dimension_numbers = #tpu.dot_dimension_numbers<[1], [0], [0], [1], [0, 0, 1, 1], [], []>} : vector<256x32xbf16>, vector<32x128xbf16>, vector<256x128xf32> -> vector<256x128xf32>
    %c0_3 = arith.constant 0 : index
    %c0_4 = arith.constant 0 : index
    %9 = vector.load %arg6[%c0_3, %c0_4] : memref<256x128xf32, #tpu.memory_space<vmem>>, vector<256x128xf32>
    %c0_5 = arith.constant 0 : index
    %c0_6 = arith.constant 0 : index
    %10 = vector.load %arg2[%c0_5, %c0_6] : memref<256x256xbf16, #tpu.memory_space<vmem>>, vector<256x256xbf16>
    %11 = arith.truncf %8 : vector<256x128xf32> to vector<256x128xbf16>
    %cst_7 = arith.constant dense<0.000000e+00> : vector<256x128xf32>
    %12 = tpu.matmul %10, %11, %cst_7 {dimension_numbers = #tpu.dot_dimension_numbers<[1], [0], [0], [1], [0, 0, 1, 1], [], []>} : vector<256x256xbf16>, vector<256x128xbf16>, vector<256x128xf32> -> vector<256x128xf32>
    %13 = arith.addf %9, %12 : vector<256x128xf32>
    %c0_8 = arith.constant 0 : index
    %c0_9 = arith.constant 0 : index
    %14 = vector.load %arg6[%c0_8, %c0_9] : memref<256x128xf32, #tpu.memory_space<vmem>>, vector<256x128xf32>
    tpu.vector_store %arg6[%c0_8, %c0_9], %13 {strides = array<i32>} : memref<256x128xf32, #tpu.memory_space<vmem>>, vector<256x128xf32>,
    %c0_i32_10 = arith.constant 0 : i32
    %15 = arith.cmpi eq, %arg1, %c0_i32_10 : i32
    %16 = arith.extui %15 : i1 to i32
    %c0_i32_11 = arith.constant 0 : i32
    %17 = arith.cmpi ne, %16, %c0_i32_11 : i32
    scf.if %17 {
      %c0_12 = arith.constant 0 : index
      %c0_13 = arith.constant 0 : index
      %18 = vector.load %arg6[%c0_12, %c0_13] : memref<256x128xf32, #tpu.memory_space<vmem>>, vector<256x128xf32>
      %c0_14 = arith.constant 0 : index
      %c0_15 = arith.constant 0 : index
      %19 = vector.load %arg5[%c0_14, %c0_15] : memref<1x128xf32, #tpu.memory_space<vmem>>, vector<1x128xf32>
      %20 = vector.broadcast %19 : vector<1x128xf32> to vector<256x128xf32>
      %21 = arith.addf %18, %20 : vector<256x128xf32>
      %cst_16 = arith.constant 0.000000e+00 : f32
      %22 = vector.broadcast %cst_16 : f32 to vector<256x128xf32>
      %23 = arith.maximumf %21, %22 : vector<256x128xf32>
      %c0_17 = arith.constant 0 : index
      %c0_18 = arith.constant 0 : index
      %24 = vector.load %arg6[%c0_17, %c0_18] : memref<256x128xf32, #tpu.memory_space<vmem>>, vector<256x128xf32>
      tpu.vector_store %arg6[%c0_17, %c0_18], %23 {strides = array<i32>} : memref<256x128xf32, #tpu.memory_space<vmem>>, vector<256x128xf32>,
    } else {
    }
    return
  }
  func.func @transform_0(%arg0: i32, %arg1: i32) -> (i32, i32) {
    %c0_i32 = arith.constant 0 : i32
    return %arg0, %arg1 : i32, i32
  }
  func.func @transform_1(%arg0: i32, %arg1: i32) -> (i32, i32) {
    %c0_i32 = arith.constant 0 : i32
    %c0_i32_0 = arith.constant 0 : i32
    %c0_i32_1 = arith.constant 0 : i32
    return %c0_i32, %c0_i32_0 : i32, i32
  }
  func.func @transform_2(%arg0: i32, %arg1: i32) -> (i32, i32) {
    %c0_i32 = arith.constant 0 : i32
    %c0_i32_0 = arith.constant 0 : i32
    %c0_i32_1 = arith.constant 0 : i32
    return %c0_i32, %c0_i32_0 : i32, i32
  }
  func.func @transform_3(%arg0: i32, %arg1: i32) -> (i32, i32) {
    %c0_i32 = arith.constant 0 : i32
    %c0_i32_0 = arith.constant 0 : i32
    %c0_i32_1 = arith.constant 0 : i32
    return %c0_i32, %c0_i32_0 : i32, i32
  }
  func.func @transform_4(%arg0: i32, %arg1: i32) -> (i32, i32) {
    %c0_i32 = arith.constant 0 : i32
    %c0_i32_0 = arith.constant 0 : i32
    return %arg0, %c0_i32 : i32, i32
  }
}

</mosaic_0001>

<llo_original>
// kernel: tpu_custom_call.1
$region0: #{tpu_custom_call.1}
  #allocation0 [shape = 'u32[]', space=smem, size = 0x4, offset = 0x4, fixed_abs, tag = 'smem constant byte address 0x4 - core index']
  #allocation1 [shape = 'u32[144,128]{1,0:T(1,128)}', space=vmem, size = 0x12000, scoped, tag = 'internal scratch']
  %s0 = inlined_call_operand.hbm [shape: bf16[256,256], index: 0, kind: input, shape index: {}]
  %s1 = inlined_call_operand.vmem [shape: bf16[256,32], index: 1, kind: input, shape index: {}]
  %s2 = inlined_call_operand.vmem [shape: bf16[32,128], index: 2, kind: input, shape index: {}]
  %s3 = inlined_call_operand.vmem [shape: f32[1,128], index: 3, kind: input, shape index: {}]
  %s4 = inlined_call_operand.hbm [shape: f32[256,128], index: 4, kind: output, shape index: {}]
  %s5 = sld [smem:[#allocation0]]
  $region38: #{tpu_custom_call.1} parent=0
    _
  %s7 = ssub.s32 1, %s5
  %s8 = scalar_select 0, %s7, %s5
  $region1: #{tpu_custom_call.1} parent=0
    #allocation2 [shape = 'u8[131072]{0}', space=vmem, size = 0x20000, scoped, tag = 'input window, operand 0, single buffered']
    #allocation3 [shape = 's32[1]{0}', space=sflag, size = 0x4, scoped, tag = 'scoped memory for tpu_custom_call.1']
    #allocation4 [shape = 's32[1]{0}', space=sflag, size = 0x4, scoped, tag = 'scoped memory for tpu_custom_call.1']
    #allocation5 [shape = 'u8[131072]{0}', space=vmem, size = 0x20000, scoped, tag = 'output window, operand 0, single buffered']
    %9 = vsyncpa [#allocation3], 0
    %10 = vsyncpa [#allocation4], 0
    // Predicated region
    $region2: #{tpu_custom_call.1} parent=1 // pred_check
      _
    $region3: #{tpu_custom_call.1} parent=1 // pred_check_branch
      %12 = sbr.rel (0) target = $region5
    $region4: #{tpu_custom_call.1} parent=1 // pred_region
      %s14 = ssub.s32 4096, 4096
      %15 = vsyncadd [#allocation3], %s14
      %s16 = sshll.u32 [#allocation2], 4
      %s17 = int_to_ptr.vmem [resolvable:$true] %s16
      %22 = dma.hbm_to_vmem [thread:$0]  %s0, 4096, %s17, [#allocation3], 128, 128, 8
    $region5: #{tpu_custom_call.1} parent=1 // pred_fallthru
      _
    // Predicated region
    $region6: #{tpu_custom_call.1} parent=1 // pred_check
      _
    $region7: #{tpu_custom_call.1} parent=1 // pred_check_branch
      %24 = sbr.rel (0) target = $region9
    $region8: #{tpu_custom_call.1} parent=1 // pred_region
      _
    $region9: #{tpu_custom_call.1} parent=1 // pred_fallthru
      _
    // Predicated region
    $region10: #{tpu_custom_call.1} parent=1 // pred_check
      _
    $region11: #{tpu_custom_call.1} parent=1 // pred_check_branch
      %26 = sbr.rel (0) target = $region13
    $region12: #{tpu_custom_call.1} parent=1 // pred_region
      _
    $region13: #{tpu_custom_call.1} parent=1 // pred_fallthru
      _
    // Predicated region
    $region14: #{tpu_custom_call.1} parent=1 // pred_check
      _
    $region15: #{tpu_custom_call.1} parent=1 // pred_check_branch
      %28 = sbr.rel (0) target = $region17
    $region16: #{tpu_custom_call.1} parent=1 // pred_region
      _
    $region17: #{tpu_custom_call.1} parent=1 // pred_fallthru
      _
    // Predicated region
    $region18: #{tpu_custom_call.1} parent=1 // pred_check
      _
    $region19: #{tpu_custom_call.1} parent=1 // pred_check_branch
      %30 = sbr.rel (0) target = $region21
    $region20: #{tpu_custom_call.1} parent=1 // pred_region
      %31 = dma.done [#allocation3], 4096
    $region21: #{tpu_custom_call.1} parent=1 // pred_fallthru
      _
    %p33 = scmp.eq.s32.totalorder 0, 0
    // Predicated region
    $region22: #{tpu_custom_call.1} parent=1 // pred_check
      %p34 = pneg %p33
    $region23: #{tpu_custom_call.1} parent=1 // pred_check_branch
      %36 = sbr.rel (%p34) target = $region25
    $region24: #{tpu_custom_call.1} parent=1 // pred_region
      %37 = vst [vmem:[#allocation5] sm:$0xff] 0.0
      %38 = vst [vmem:[#allocation5 + $0x8] sm:$0xff] 0.0
      %39 = vst [vmem:[#allocation5 + $0x10] sm:$0xff] 0.0
      %40 = vst [vmem:[#allocation5 + $0x18] sm:$0xff] 0.0
      %41 = vst [vmem:[#allocation5 + $0x20] sm:$0xff] 0.0
      %42 = vst [vmem:[#allocation5 + $0x28] sm:$0xff] 0.0
      %43 = vst [vmem:[#allocation5 + $0x30] sm:$0xff] 0.0
      %44 = vst [vmem:[#allocation5 + $0x38] sm:$0xff] 0.0
      %45 = vst [vmem:[#allocation5 + $0x40] sm:$0xff] 0.0
      %46 = vst [vmem:[#allocation5 + $0x48] sm:$0xff] 0.0
      %47 = vst [vmem:[#allocation5 + $0x50] sm:$0xff] 0.0
      %48 = vst [vmem:[#allocation5 + $0x58] sm:$0xff] 0.0
      %49 = vst [vmem:[#allocation5 + $0x60] sm:$0xff] 0.0
      %50 = vst [vmem:[#allocation5 + $0x68] sm:$0xff] 0.0
      %51 = vst [vmem:[#allocation5 + $0x70] sm:$0xff] 0.0
      %52 = vst [vmem:[#allocation5 + $0x78] sm:$0xff] 0.0
      %53 = vst [vmem:[#allocation5 + $0x80] sm:$0xff] 0.0
      %54 = vst [vmem:[#allocation5 + $0x88] sm:$0xff] 0.0
      %55 = vst [vmem:[#allocation5 + $0x90] sm:$0xff] 0.0
      %56 = vst [vmem:[#allocation5 + $0x98] sm:$0xff] 0.0
      %57 = vst [vmem:[#allocation5 + $0xa0] sm:$0xff] 0.0
      %58 = vst [vmem:[#allocation5 + $0xa8] sm:$0xff] 0.0
      %59 = vst [vmem:[#allocation5 + $0xb0] sm:$0xff] 0.0
      %60 = vst [vmem:[#allocation5 + $0xb8] sm:$0xff] 0.0
      %61 = vst [vmem:[#allocation5 + $0xc0] sm:$0xff] 0.0
      %62 = vst [vmem:[#allocation5 + $0xc8] sm:$0xff] 0.0
      %63 = vst [vmem:[#allocation5 + $0xd0] sm:$0xff] 0.0
      %64 = vst [vmem:[#allocation5 + $0xd8] sm:$0xff] 0.0
      %65 = vst [vmem:[#allocation5 + $0xe0] sm:$0xff] 0.0
      %66 = vst [vmem:[#allocation5 + $0xe8] sm:$0xff] 0.0
      %67 = vst [vmem:[#allocation5 + $0xf0] sm:$0xff] 0.0
      %68 = vst [vmem:[#allocation5 + $0xf8] sm:$0xff] 0.0
    $region25: #{tpu_custom_call.1} parent=1 // pred_fallthru
      _
    %s69 = smul.u32 0, 256
    %s70 = sshra.s32 %s69, 3
    %s71 = sand.u32 %s69, 7
    %s72 = smul.addr %s70, 4
    %s73 = scalar_lea.vmem %s1, %s72
    %v74 = vld [vmem:[%s73] sm:$0xf]
    %v75 = vld [vmem:[%s73 + $0x4] sm:$0xf]
    %v76 = vld [vmem:[%s73 + $0x8] sm:$0xf]
    %v77 = vld [vmem:[%s73 + $0xc] sm:$0xf]
    %v78 = vld [vmem:[%s73 + $0x10] sm:$0xf]
    %v79 = vld [vmem:[%s73 + $0x14] sm:$0xf]
    %v80 = vld [vmem:[%s73 + $0x18] sm:$0xf]
    %v81 = vld [vmem:[%s73 + $0x1c] sm:$0xf]
    %v82 = vld [vmem:[%s73 + $0x20] sm:$0xf]
    %v83 = vld [vmem:[%s73 + $0x24] sm:$0xf]
    %v84 = vld [vmem:[%s73 + $0x28] sm:$0xf]
    %v85 = vld [vmem:[%s73 + $0x2c] sm:$0xf]
    %v86 = vld [vmem:[%s73 + $0x30] sm:$0xf]
    %v87 = vld [vmem:[%s73 + $0x34] sm:$0xf]
    %v88 = vld [vmem:[%s73 + $0x38] sm:$0xf]
    %v89 = vld [vmem:[%s73 + $0x3c] sm:$0xf]
    %v90 = vld [vmem:[%s73 + $0x40] sm:$0xf]
    %v91 = vld [vmem:[%s73 + $0x44] sm:$0xf]
    %v92 = vld [vmem:[%s73 + $0x48] sm:$0xf]
    %v93 = vld [vmem:[%s73 + $0x4c] sm:$0xf]
    %v94 = vld [vmem:[%s73 + $0x50] sm:$0xf]
    %v95 = vld [vmem:[%s73 + $0x54] sm:$0xf]
    %v96 = vld [vmem:[%s73 + $0x58] sm:$0xf]
    %v97 = vld [vmem:[%s73 + $0x5c] sm:$0xf]
    %v98 = vld [vmem:[%s73 + $0x60] sm:$0xf]
    %v99 = vld [vmem:[%s73 + $0x64] sm:$0xf]
    %v100 = vld [vmem:[%s73 + $0x68] sm:$0xf]
    %v101 = vld [vmem:[%s73 + $0x6c] sm:$0xf]
    %v102 = vld [vmem:[%s73 + $0x70] sm:$0xf]
    %v103 = vld [vmem:[%s73 + $0x74] sm:$0xf]
    %v104 = vld [vmem:[%s73 + $0x78] sm:$0xf]
    %v105 = vld [vmem:[%s73 + $0x7c] sm:$0xf]
    %v106 = vld [vmem:[%s2] sm:$0xf]
    %v107 = vld [vmem:[%s2 + $0x4] sm:$0xf]
    %v108 = vld [vmem:[%s2 + $0x8] sm:$0xf]
    %v109 = vld [vmem:[%s2 + $0xc] sm:$0xf]
    %v142 = vunpack.c.l.b16 %v74
    %v143 = vunpack.c.l.b16 %v75
    %v144 = vunpack.c.l.b16 %v76
    %v145 = vunpack.c.l.b16 %v77
    %v146 = vunpack.c.l.b16 %v78
    %v147 = vunpack.c.l.b16 %v79
    %v148 = vunpack.c.l.b16 %v80
    %v149 = vunpack.c.l.b16 %v81
    %v150 = vunpack.c.l.b16 %v82
    %v151 = vunpack.c.l.b16 %v83
    %v152 = vunpack.c.l.b16 %v84
    %v153 = vunpack.c.l.b16 %v85
    %v154 = vunpack.c.l.b16 %v86
    %v155 = vunpack.c.l.b16 %v87
    %v156 = vunpack.c.l.b16 %v88
    %v157 = vunpack.c.l.b16 %v89
    %v158 = vunpack.c.l.b16 %v90
    %v159 = vunpack.c.l.b16 %v91
    %v160 = vunpack.c.l.b16 %v92
    %v161 = vunpack.c.l.b16 %v93
    %v162 = vunpack.c.l.b16 %v94
    %v163 = vunpack.c.l.b16 %v95
    %v164 = vunpack.c.l.b16 %v96
    %v165 = vunpack.c.l.b16 %v97
    %v166 = vunpack.c.l.b16 %v98
    %v167 = vunpack.c.l.b16 %v99
    %v168 = vunpack.c.l.b16 %v100
    %v169 = vunpack.c.l.b16 %v101
    %v170 = vunpack.c.l.b16 %v102
    %v171 = vunpack.c.l.b16 %v103
    %v172 = vunpack.c.l.b16 %v104
    %v173 = vunpack.c.l.b16 %v105
    %v174 = vpack.c.b16 %v143, %v142
    %v175 = vpack.c.b16 %v145, %v144
    %v176 = vpack.c.b16 %v147, %v146
    %v177 = vpack.c.b16 %v149, %v148
    %v178 = vpack.c.b16 %v151, %v150
    %v179 = vpack.c.b16 %v153, %v152
    %v180 = vpack.c.b16 %v155, %v154
    %v181 = vpack.c.b16 %v157, %v156
    %v182 = vpack.c.b16 %v159, %v158
    %v183 = vpack.c.b16 %v161, %v160
    %v184 = vpack.c.b16 %v163, %v162
    %v185 = vpack.c.b16 %v165, %v164
    %v186 = vpack.c.b16 %v167, %v166
    %v187 = vpack.c.b16 %v169, %v168
    %v188 = vpack.c.b16 %v171, %v170
    %v189 = vpack.c.b16 %v173, %v172
    %v194 = vunpack.c.l.b16 %v106
    %v195 = vunpack.c.l.b16 %v107
    %v196 = vunpack.c.l.b16 %v108
    %v197 = vunpack.c.l.b16 %v109
    %v198 = vpack.c.b16 %v195, %v194
    %v199 = vpack.c.b16 %v197, %v196
    %vm202 = vcmask 261120
    %v204 = vsel %vm202, %v174, 0
    %v207 = vsel %vm202, %v175, 0
    %v210 = vsel %vm202, %v176, 0
    %v213 = vsel %vm202, %v177, 0
    %v216 = vsel %vm202, %v178, 0
    %v219 = vsel %vm202, %v179, 0
    %v222 = vsel %vm202, %v180, 0
    %v225 = vsel %vm202, %v181, 0
    %v228 = vsel %vm202, %v182, 0
    %v231 = vsel %vm202, %v183, 0
    %v234 = vsel %vm202, %v184, 0
    %v237 = vsel %vm202, %v185, 0
    %v240 = vsel %vm202, %v186, 0
    %v243 = vsel %vm202, %v187, 0
    %v246 = vsel %vm202, %v188, 0
    %v249 = vsel %vm202, %v189, 0
    %251 = vmatprep.subr.bf16.mxu0 0
    %252 = vmatpush1.bf16.msra.mxu0 0
    %253 = vmatprep.subr.bf16.mxu0 0
    %254 = vmatpush1.bf16.msra.mxu0 0
    %255 = vmatprep.subr.bf16.mxu0 0
    %256 = vmatpush1.bf16.msra.mxu0 0
    %257 = vmatprep.subr.bf16.mxu0 0
    %258 = vmatpush1.bf16.msra.mxu0 0
    %259 = vmatprep.subr.bf16.mxu0 0
    %260 = vmatpush1.bf16.msra.mxu0 0
    %261 = vmatprep.subr.bf16.mxu0 0
    %262 = vmatpush1.bf16.msra.mxu0 0
    %263 = vmatprep.subr.bf16.mxu0 0
    %264 = vmatpush1.bf16.msra.mxu0 %v199
    %265 = vmatprep.subr.bf16.mxu0 0
    %266 = vmatpush1.bf16.msra.mxu0 %v198
    %267 = vmatprep.subr.bf16.mxu0 0
    %268 = vmatpush2.bf16.msra.mxu0 0
    %269 = vmatprep.subr.bf16.mxu0 0
    %270 = vmatpush2.bf16.msra.mxu0 0
    %271 = vmatprep.subr.bf16.mxu0 0
    %272 = vmatpush2.bf16.msra.mxu0 0
    %273 = vmatprep.subr.bf16.mxu0 0
    %274 = vmatpush2.bf16.msra.mxu0 0
    %275 = vmatprep.subr.bf16.mxu0 0
    %276 = vmatpush2.bf16.msra.mxu0 0
    %277 = vmatprep.subr.bf16.mxu0 0
    %278 = vmatpush2.bf16.msra.mxu0 0
    %279 = vmatprep.subr.bf16.mxu0 0
    %280 = vmatpush2.bf16.msra.mxu0 0
    %281 = vmatprep.subr.bf16.mxu0 0
    %282 = vmatpush2.bf16.msra.mxu0 0
    %283 = vmatprep.mubr.bf16.mxu0 0
    %284 = vmatmul.mubr.bf16.gmra.mxu0 %v204
    %v285 = vpop.f32.mrf.mxu0
    %v286 = vadd.f32 0.0, %v285
    %v287 = vpop.f32.mrf.mxu0
    %v288 = vpop.f32.mrf.mxu0
    %v289 = vadd.f32 0.0, %v288
    %v290 = vpop.f32.mrf.mxu0
    %291 = vmatprep.mubr.bf16.mxu0 0
    %292 = vmatmul.mubr.bf16.gmra.mxu0 %v207
    %v293 = vpop.f32.mrf.mxu0
    %v294 = vadd.f32 0.0, %v293
    %v295 = vpop.f32.mrf.mxu0
    %v296 = vpop.f32.mrf.mxu0
    %v297 = vadd.f32 0.0, %v296
    %v298 = vpop.f32.mrf.mxu0
    %299 = vmatprep.mubr.bf16.mxu0 0
    %300 = vmatmul.mubr.bf16.gmra.mxu0 %v210
    %v301 = vpop.f32.mrf.mxu0
    %v302 = vadd.f32 0.0, %v301
    %v303 = vpop.f32.mrf.mxu0
    %v304 = vpop.f32.mrf.mxu0
    %v305 = vadd.f32 0.0, %v304
    %v306 = vpop.f32.mrf.mxu0
    %307 = vmatprep.mubr.bf16.mxu0 0
    %308 = vmatmul.mubr.bf16.gmra.mxu0 %v213
    %v309 = vpop.f32.mrf.mxu0
    %v310 = vadd.f32 0.0, %v309
    %v311 = vpop.f32.mrf.mxu0
    %v312 = vpop.f32.mrf.mxu0
    %v313 = vadd.f32 0.0, %v312
    %v314 = vpop.f32.mrf.mxu0
    %315 = vmatprep.mubr.bf16.mxu0 0
    %316 = vmatmul.mubr.bf16.gmra.mxu0 %v216
    %v317 = vpop.f32.mrf.mxu0
    %v318 = vadd.f32 0.0, %v317
    %v319 = vpop.f32.mrf.mxu0
    %v320 = vpop.f32.mrf.mxu0
    %v321 = vadd.f32 0.0, %v320
    %v322 = vpop.f32.mrf.mxu0
    %323 = vmatprep.mubr.bf16.mxu0 0
    %324 = vmatmul.mubr.bf16.gmra.mxu0 %v219
    %v325 = vpop.f32.mrf.mxu0
    %v326 = vadd.f32 0.0, %v325
    %v327 = vpop.f32.mrf.mxu0
    %v328 = vpop.f32.mrf.mxu0
    %v329 = vadd.f32 0.0, %v328
    %v330 = vpop.f32.mrf.mxu0
    %331 = vmatprep.mubr.bf16.mxu0 0
    %332 = vmatmul.mubr.bf16.gmra.mxu0 %v222
    %v333 = vpop.f32.mrf.mxu0
    %v334 = vadd.f32 0.0, %v333
    %v335 = vpop.f32.mrf.mxu0
    %v336 = vpop.f32.mrf.mxu0
    %v337 = vadd.f32 0.0, %v336
    %v338 = vpop.f32.mrf.mxu0
    %339 = vmatprep.mubr.bf16.mxu0 0
    %340 = vmatmul.mubr.bf16.gmra.mxu0 %v225
    %v341 = vpop.f32.mrf.mxu0
    %v342 = vadd.f32 0.0, %v341
    %v343 = vpop.f32.mrf.mxu0
    %v344 = vpop.f32.mrf.mxu0
    %v345 = vadd.f32 0.0, %v344
    %v346 = vpop.f32.mrf.mxu0
    %347 = vmatprep.mubr.bf16.mxu0 0
    %348 = vmatmul.mubr.bf16.gmra.mxu0 %v228
    %v349 = vpop.f32.mrf.mxu0
    %v350 = vadd.f32 0.0, %v349
    %v351 = vpop.f32.mrf.mxu0
    %v352 = vpop.f32.mrf.mxu0
    %v353 = vadd.f32 0.0, %v352
    %v354 = vpop.f32.mrf.mxu0
    %355 = vmatprep.mubr.bf16.mxu0 0
    %356 = vmatmul.mubr.bf16.gmra.mxu0 %v231
    %v357 = vpop.f32.mrf.mxu0
    %v358 = vadd.f32 0.0, %v357
    %v359 = vpop.f32.mrf.mxu0
    %v360 = vpop.f32.mrf.mxu0
    %v361 = vadd.f32 0.0, %v360
    %v362 = vpop.f32.mrf.mxu0
    %363 = vmatprep.mubr.bf16.mxu0 0
    %364 = vmatmul.mubr.bf16.gmra.mxu0 %v234
    %v365 = vpop.f32.mrf.mxu0
    %v366 = vadd.f32 0.0, %v365
    %v367 = vpop.f32.mrf.mxu0
    %v368 = vpop.f32.mrf.mxu0
    %v369 = vadd.f32 0.0, %v368
    %v370 = vpop.f32.mrf.mxu0
    %371 = vmatprep.mubr.bf16.mxu0 0
    %372 = vmatmul.mubr.bf16.gmra.mxu0 %v237
    %v373 = vpop.f32.mrf.mxu0
    %v374 = vadd.f32 0.0, %v373
    %v375 = vpop.f32.mrf.mxu0
    %v376 = vpop.f32.mrf.mxu0
    %v377 = vadd.f32 0.0, %v376
    %v378 = vpop.f32.mrf.mxu0
    %379 = vmatprep.mubr.bf16.mxu0 0
    %380 = vmatmul.mubr.bf16.gmra.mxu0 %v240
    %v381 = vpop.f32.mrf.mxu0
    %v382 = vadd.f32 0.0, %v381
    %v383 = vpop.f32.mrf.mxu0
    %v384 = vpop.f32.mrf.mxu0
    %v385 = vadd.f32 0.0, %v384
    %v386 = vpop.f32.mrf.mxu0
    %387 = vmatprep.mubr.bf16.mxu0 0
    %388 = vmatmul.mubr.bf16.gmra.mxu0 %v243
    %v389 = vpop.f32.mrf.mxu0
    %v390 = vadd.f32 0.0, %v389
    %v391 = vpop.f32.mrf.mxu0
    %v392 = vpop.f32.mrf.mxu0
    %v393 = vadd.f32 0.0, %v392
    %v394 = vpop.f32.mrf.mxu0
    %395 = vmatprep.mubr.bf16.mxu0 0
    %396 = vmatmul.mubr.bf16.gmra.mxu0 %v246
    %v397 = vpop.f32.mrf.mxu0
    %v398 = vadd.f32 0.0, %v397
    %v399 = vpop.f32.mrf.mxu0
    %v400 = vpop.f32.mrf.mxu0
    %v401 = vadd.f32 0.0, %v400
    %v402 = vpop.f32.mrf.mxu0
    %403 = vmatprep.mubr.bf16.mxu0 0
    %404 = vmatmul.mubr.bf16.gmra.mxu0 %v249
    %v405 = vpop.f32.mrf.mxu0
    %v406 = vadd.f32 0.0, %v405
    %v407 = vpop.f32.mrf.mxu0
    %v408 = vpop.f32.mrf.mxu0
    %v409 = vadd.f32 0.0, %v408
    %v410 = vpop.f32.mrf.mxu0
    %411 = vdwg.mxu0
    %v412 = vld [vmem:[#allocation5] sm:$0xff]
    %v413 = vld [vmem:[#allocation5 + $0x8] sm:$0xff]
    %v414 = vld [vmem:[#allocation5 + $0x10] sm:$0xff]
    %v415 = vld [vmem:[#allocation5 + $0x18] sm:$0xff]
    %v416 = vld [vmem:[#allocation5 + $0x20] sm:$0xff]
    %v417 = vld [vmem:[#allocation5 + $0x28] sm:$0xff]
    %v418 = vld [vmem:[#allocation5 + $0x30] sm:$0xff]
    %v419 = vld [vmem:[#allocation5 + $0x38] sm:$0xff]
    %v420 = vld [vmem:[#allocation5 + $0x40] sm:$0xff]
    %v421 = vld [vmem:[#allocation5 + $0x48] sm:$0xff]
    %v422 = vld [vmem:[#allocation5 + $0x50] sm:$0xff]
    %v423 = vld [vmem:[#allocation5 + $0x58] sm:$0xff]
    %v424 = vld [vmem:[#allocation5 + $0x60] sm:$0xff]
    %v425 = vld [vmem:[#allocation5 + $0x68] sm:$0xff]
    %v426 = vld [vmem:[#allocation5 + $0x70] sm:$0xff]
    %v427 = vld [vmem:[#allocation5 + $0x78] sm:$0xff]
    %v428 = vld [vmem:[#allocation5 + $0x80] sm:$0xff]
    %v429 = vld [vmem:[#allocation5 + $0x88] sm:$0xff]
    %v430 = vld [vmem:[#allocation5 + $0x90] sm:$0xff]
    %v431 = vld [vmem:[#allocation5 + $0x98] sm:$0xff]
    %v432 = vld [vmem:[#allocation5 + $0xa0] sm:$0xff]
    %v433 = vld [vmem:[#allocation5 + $0xa8] sm:$0xff]
    %v434 = vld [vmem:[#allocation5 + $0xb0] sm:$0xff]
    %v435 = vld [vmem:[#allocation5 + $0xb8] sm:$0xff]
    %v436 = vld [vmem:[#allocation5 + $0xc0] sm:$0xff]
    %v437 = vld [vmem:[#allocation5 + $0xc8] sm:$0xff]
    %v438 = vld [vmem:[#allocation5 + $0xd0] sm:$0xff]
    %v439 = vld [vmem:[#allocation5 + $0xd8] sm:$0xff]
    %v440 = vld [vmem:[#allocation5 + $0xe0] sm:$0xff]
    %v441 = vld [vmem:[#allocation5 + $0xe8] sm:$0xff]
    %v442 = vld [vmem:[#allocation5 + $0xf0] sm:$0xff]
    %v443 = vld [vmem:[#allocation5 + $0xf8] sm:$0xff]
    %v444 = vld [vmem:[#allocation2] sm:$0xff]
    %v445 = vld [vmem:[#allocation2 + $0x8] sm:$0xff]
    %v446 = vld [vmem:[#allocation2 + $0x10] sm:$0xff]
    %v447 = vld [vmem:[#allocation2 + $0x18] sm:$0xff]
    %v448 = vld [vmem:[#allocation2 + $0x20] sm:$0xff]
    %v449 = vld [vmem:[#allocation2 + $0x28] sm:$0xff]
    %v450 = vld [vmem:[#allocation2 + $0x30] sm:$0xff]
    %v451 = vld [vmem:[#allocation2 + $0x38] sm:$0xff]
    %v452 = vld [vmem:[#allocation2 + $0x40] sm:$0xff]
    %v453 = vld [vmem:[#allocation2 + $0x48] sm:$0xff]
    %v454 = vld [vmem:[#allocation2 + $0x50] sm:$0xff]
    %v455 = vld [vmem:[#allocation2 + $0x58] sm:$0xff]
    %v456 = vld [vmem:[#allocation2 + $0x60] sm:$0xff]
    %v457 = vld [vmem:[#allocation2 + $0x68] sm:$0xff]
    %v458 = vld [vmem:[#allocation2 + $0x70] sm:$0xff]
    %v459 = vld [vmem:[#allocation2 + $0x78] sm:$0xff]
    %v460 = vld [vmem:[#allocation2 + $0x80] sm:$0xff]
    %v461 = vld [vmem:[#allocation2 + $0x88] sm:$0xff]
    %v462 = vld [vmem:[#allocation2 + $0x90] sm:$0xff]
    %v463 = vld [vmem:[#allocation2 + $0x98] sm:$0xff]
    %v464 = vld [vmem:[#allocation2 + $0xa0] sm:$0xff]
    %v465 = vld [vmem:[#allocation2 + $0xa8] sm:$0xff]
    %v466 = vld [vmem:[#allocation2 + $0xb0] sm:$0xff]
    %v467 = vld [vmem:[#allocation2 + $0xb8] sm:$0xff]
    %v468 = vld [vmem:[#allocation2 + $0xc0] sm:$0xff]
    %v469 = vld [vmem:[#allocation2 + $0xc8] sm:$0xff]
    %v470 = vld [vmem:[#allocation2 + $0xd0] sm:$0xff]
    %v471 = vld [vmem:[#allocation2 + $0xd8] sm:$0xff]
    %v472 = vld [vmem:[#allocation2 + $0xe0] sm:$0xff]
    %v473 = vld [vmem:[#allocation2 + $0xe8] sm:$0xff]
    %v474 = vld [vmem:[#allocation2 + $0xf0] sm:$0xff]
    %v475 = vld [vmem:[#allocation2 + $0xf8] sm:$0xff]
    %v476 = vpack.c.bf16 %v289, %v286
    %v477 = vpack.c.bf16 %v297, %v294
    %v478 = vpack.c.bf16 %v305, %v302
    %v479 = vpack.c.bf16 %v313, %v310
    %v480 = vpack.c.bf16 %v321, %v318
    %v481 = vpack.c.bf16 %v329, %v326
    %v482 = vpack.c.bf16 %v337, %v334
    %v483 = vpack.c.bf16 %v345, %v342
    %v484 = vpack.c.bf16 %v353, %v350
    %v485 = vpack.c.bf16 %v361, %v358
    %v486 = vpack.c.bf16 %v369, %v366
    %v487 = vpack.c.bf16 %v377, %v374
    %v488 = vpack.c.bf16 %v385, %v382
    %v489 = vpack.c.bf16 %v393, %v390
    %v490 = vpack.c.bf16 %v401, %v398
    %v491 = vpack.c.bf16 %v409, %v406
    %v524 = vunpack.c.l.b16 %v444
    %v525 = vunpack.c.h.b16 %v444
    %v526 = vunpack.c.l.b16 %v445
    %v527 = vunpack.c.h.b16 %v445
    %v528 = vunpack.c.l.b16 %v446
    %v529 = vunpack.c.h.b16 %v446
    %v530 = vunpack.c.l.b16 %v447
    %v531 = vunpack.c.h.b16 %v447
    %v532 = vunpack.c.l.b16 %v448
    %v533 = vunpack.c.h.b16 %v448
    %v534 = vunpack.c.l.b16 %v449
    %v535 = vunpack.c.h.b16 %v449
    %v536 = vunpack.c.l.b16 %v450
    %v537 = vunpack.c.h.b16 %v450
    %v538 = vunpack.c.l.b16 %v451
    %v539 = vunpack.c.h.b16 %v451
    %v540 = vunpack.c.l.b16 %v452
    %v541 = vunpack.c.h.b16 %v452
    %v542 = vunpack.c.l.b16 %v453
    %v543 = vunpack.c.h.b16 %v453
    %v544 = vunpack.c.l.b16 %v454
    %v545 = vunpack.c.h.b16 %v454
    %v546 = vunpack.c.l.b16 %v455
    %v547 = vunpack.c.h.b16 %v455
    %v548 = vunpack.c.l.b16 %v456
    %v549 = vunpack.c.h.b16 %v456
    %v550 = vunpack.c.l.b16 %v457
    %v551 = vunpack.c.h.b16 %v457
    %v552 = vunpack.c.l.b16 %v458
    %v553 = vunpack.c.h.b16 %v458
    %v554 = vunpack.c.l.b16 %v459
    %v555 = vunpack.c.h.b16 %v459
    %v556 = vunpack.c.l.b16 %v460
    %v557 = vunpack.c.h.b16 %v460
    %v558 = vunpack.c.l.b16 %v461
    %v559 = vunpack.c.h.b16 %v461
    %v560 = vunpack.c.l.b16 %v462
    %v561 = vunpack.c.h.b16 %v462
    %v562 = vunpack.c.l.b16 %v463
    %v563 = vunpack.c.h.b16 %v463
    %v564 = vunpack.c.l.b16 %v464
    %v565 = vunpack.c.h.b16 %v464
    %v566 = vunpack.c.l.b16 %v465
    %v567 = vunpack.c.h.b16 %v465
    %v568 = vunpack.c.l.b16 %v466
    %v569 = vunpack.c.h.b16 %v466
    %v570 = vunpack.c.l.b16 %v467
    %v571 = vunpack.c.h.b16 %v467
    %v572 = vunpack.c.l.b16 %v468
    %v573 = vunpack.c.h.b16 %v468
    %v574 = vunpack.c.l.b16 %v469
    %v575 = vunpack.c.h.b16 %v469
    %v576 = vunpack.c.l.b16 %v470
    %v577 = vunpack.c.h.b16 %v470
    %v578 = vunpack.c.l.b16 %v471
    %v579 = vunpack.c.h.b16 %v471
    %v580 = vunpack.c.l.b16 %v472
    %v581 = vunpack.c.h.b16 %v472
    %v582 = vunpack.c.l.b16 %v473
    %v583 = vunpack.c.h.b16 %v473
    %v584 = vunpack.c.l.b16 %v474
    %v585 = vunpack.c.h.b16 %v474
    %v586 = vunpack.c.l.b16 %v475
    %v587 = vunpack.c.h.b16 %v475
    %v588 = vpack.c.b16 %v526, %v524
    %v589 = vpack.c.b16 %v527, %v525
    %v590 = vpack.c.b16 %v530, %v528
    %v591 = vpack.c.b16 %v531, %v529
    %v592 = vpack.c.b16 %v534, %v532
    %v593 = vpack.c.b16 %v535, %v533
    %v594 = vpack.c.b16 %v538, %v536
    %v595 = vpack.c.b16 %v539, %v537
    %v596 = vpack.c.b16 %v542, %v540
    %v597 = vpack.c.b16 %v543, %v541
    %v598 = vpack.c.b16 %v546, %v544
    %v599 = vpack.c.b16 %v547, %v545
    %v600 = vpack.c.b16 %v550, %v548
    %v601 = vpack.c.b16 %v551, %v549
    %v602 = vpack.c.b16 %v554, %v552
    %v603 = vpack.c.b16 %v555, %v553
    %v604 = vpack.c.b16 %v558, %v556
    %v605 = vpack.c.b16 %v559, %v557
    %v606 = vpack.c.b16 %v562, %v560
    %v607 = vpack.c.b16 %v563, %v561
    %v608 = vpack.c.b16 %v566, %v564
    %v609 = vpack.c.b16 %v567, %v565
    %v610 = vpack.c.b16 %v570, %v568
    %v611 = vpack.c.b16 %v571, %v569
    %v612 = vpack.c.b16 %v574, %v572
    %v613 = vpack.c.b16 %v575, %v573
    %v614 = vpack.c.b16 %v578, %v576
    %v615 = vpack.c.b16 %v579, %v577
    %v616 = vpack.c.b16 %v582, %v580
    %v617 = vpack.c.b16 %v583, %v581
    %v618 = vpack.c.b16 %v586, %v584
    %v619 = vpack.c.b16 %v587, %v585
    %652 = vmatprep.subr.bf16.mxu0 0
    %653 = vmatpush1.bf16.msra.mxu0 %v483
    %654 = vmatprep.subr.bf16.mxu0 0
    %655 = vmatpush1.bf16.msra.mxu0 %v482
    %656 = vmatprep.subr.bf16.mxu0 0
    %657 = vmatpush1.bf16.msra.mxu0 %v481
    %658 = vmatprep.subr.bf16.mxu0 0
    %659 = vmatpush1.bf16.msra.mxu0 %v480
    %660 = vmatprep.subr.bf16.mxu0 0
    %661 = vmatpush1.bf16.msra.mxu0 %v479
    %662 = vmatprep.subr.bf16.mxu0 0
    %663 = vmatpush1.bf16.msra.mxu0 %v478
    %664 = vmatprep.subr.bf16.mxu0 0
    %665 = vmatpush1.bf16.msra.mxu0 %v477
    %666 = vmatprep.subr.bf16.mxu0 0
    %667 = vmatpush1.bf16.msra.mxu0 %v476
    %668 = vmatprep.subr.bf16.mxu0 0
    %669 = vmatpush2.bf16.msra.mxu0 %v491
    %670 = vmatprep.subr.bf16.mxu0 0
    %671 = vmatpush2.bf16.msra.mxu0 %v490
    %672 = vmatprep.subr.bf16.mxu0 0
    %673 = vmatpush2.bf16.msra.mxu0 %v489
    %674 = vmatprep.subr.bf16.mxu0 0
    %675 = vmatpush2.bf16.msra.mxu0 %v488
    %676 = vmatprep.subr.bf16.mxu0 0
    %677 = vmatpush2.bf16.msra.mxu0 %v487
    %678 = vmatprep.subr.bf16.mxu0 0
    %679 = vmatpush2.bf16.msra.mxu0 %v486
    %680 = vmatprep.subr.bf16.mxu0 0
    %681 = vmatpush2.bf16.msra.mxu0 %v485
    %682 = vmatprep.subr.bf16.mxu0 0
    %683 = vmatpush2.bf16.msra.mxu0 %v484
    %684 = vmatprep.mubr.bf16.mxu0 %v589
    %685 = vmatmul.mubr.bf16.gmra.mxu0 %v588
    %v686 = vpop.f32.mrf.mxu0
    %v687 = vadd.f32 0.0, %v686
    %v688 = vpop.f32.mrf.mxu0
    %v689 = vpop.f32.mrf.mxu0
    %v690 = vadd.f32 0.0, %v689
    %v691 = vpop.f32.mrf.mxu0
    %692 = vmatprep.mubr.bf16.mxu0 %v591
    %693 = vmatmul.mubr.bf16.gmra.mxu0 %v590
    %v694 = vpop.f32.mrf.mxu0
    %v695 = vadd.f32 0.0, %v694
    %v696 = vpop.f32.mrf.mxu0
    %v697 = vpop.f32.mrf.mxu0
    %v698 = vadd.f32 0.0, %v697
    %v699 = vpop.f32.mrf.mxu0
    %700 = vmatprep.mubr.bf16.mxu0 %v593
    %701 = vmatmul.mubr.bf16.gmra.mxu0 %v592
    %v702 = vpop.f32.mrf.mxu0
    %v703 = vadd.f32 0.0, %v702
    %v704 = vpop.f32.mrf.mxu0
    %v705 = vpop.f32.mrf.mxu0
    %v706 = vadd.f32 0.0, %v705
    %v707 = vpop.f32.mrf.mxu0
    %708 = vmatprep.mubr.bf16.mxu0 %v595
    %709 = vmatmul.mubr.bf16.gmra.mxu0 %v594
    %v710 = vpop.f32.mrf.mxu0
    %v711 = vadd.f32 0.0, %v710
    %v712 = vpop.f32.mrf.mxu0
    %v713 = vpop.f32.mrf.mxu0
    %v714 = vadd.f32 0.0, %v713
    %v715 = vpop.f32.mrf.mxu0
    %716 = vmatprep.mubr.bf16.mxu0 %v597
    %717 = vmatmul.mubr.bf16.gmra.mxu0 %v596
    %v718 = vpop.f32.mrf.mxu0
    %v719 = vadd.f32 0.0, %v718
    %v720 = vpop.f32.mrf.mxu0
    %v721 = vpop.f32.mrf.mxu0
    %v722 = vadd.f32 0.0, %v721
    %v723 = vpop.f32.mrf.mxu0
    %724 = vmatprep.mubr.bf16.mxu0 %v599
    %725 = vmatmul.mubr.bf16.gmra.mxu0 %v598
    %v726 = vpop.f32.mrf.mxu0
    %v727 = vadd.f32 0.0, %v726
    %v728 = vpop.f32.mrf.mxu0
    %v729 = vpop.f32.mrf.mxu0
    %v730 = vadd.f32 0.0, %v729
    %v731 = vpop.f32.mrf.mxu0
    %732 = vmatprep.mubr.bf16.mxu0 %v601
    %733 = vmatmul.mubr.bf16.gmra.mxu0 %v600
    %v734 = vpop.f32.mrf.mxu0
    %v735 = vadd.f32 0.0, %v734
    %v736 = vpop.f32.mrf.mxu0
    %v737 = vpop.f32.mrf.mxu0
    %v738 = vadd.f32 0.0, %v737
    %v739 = vpop.f32.mrf.mxu0
    %740 = vmatprep.mubr.bf16.mxu0 %v603
    %741 = vmatmul.mubr.bf16.gmra.mxu0 %v602
    %v742 = vpop.f32.mrf.mxu0
    %v743 = vadd.f32 0.0, %v742
    %v744 = vpop.f32.mrf.mxu0
    %v745 = vpop.f32.mrf.mxu0
    %v746 = vadd.f32 0.0, %v745
    %v747 = vpop.f32.mrf.mxu0
    %748 = vmatprep.mubr.bf16.mxu0 %v605
    %749 = vmatmul.mubr.bf16.gmra.mxu0 %v604
    %v750 = vpop.f32.mrf.mxu0
    %v751 = vadd.f32 0.0, %v750
    %v752 = vpop.f32.mrf.mxu0
    %v753 = vpop.f32.mrf.mxu0
    %v754 = vadd.f32 0.0, %v753
    %v755 = vpop.f32.mrf.mxu0
    %756 = vmatprep.mubr.bf16.mxu0 %v607
    %757 = vmatmul.mubr.bf16.gmra.mxu0 %v606
    %v758 = vpop.f32.mrf.mxu0
    %v759 = vadd.f32 0.0, %v758
    %v760 = vpop.f32.mrf.mxu0
    %v761 = vpop.f32.mrf.mxu0
    %v762 = vadd.f32 0.0, %v761
    %v763 = vpop.f32.mrf.mxu0
    %764 = vmatprep.mubr.bf16.mxu0 %v609
    %765 = vmatmul.mubr.bf16.gmra.mxu0 %v608
    %v766 = vpop.f32.mrf.mxu0
    %v767 = vadd.f32 0.0, %v766
    %v768 = vpop.f32.mrf.mxu0
    %v769 = vpop.f32.mrf.mxu0
    %v770 = vadd.f32 0.0, %v769
    %v771 = vpop.f32.mrf.mxu0
    %772 = vmatprep.mubr.bf16.mxu0 %v611
    %773 = vmatmul.mubr.bf16.gmra.mxu0 %v610
    %v774 = vpop.f32.mrf.mxu0
    %v775 = vadd.f32 0.0, %v774
    %v776 = vpop.f32.mrf.mxu0
    %v777 = vpop.f32.mrf.mxu0
    %v778 = vadd.f32 0.0, %v777
    %v779 = vpop.f32.mrf.mxu0
    %780 = vmatprep.mubr.bf16.mxu0 %v613
    %781 = vmatmul.mubr.bf16.gmra.mxu0 %v612
    %v782 = vpop.f32.mrf.mxu0
    %v783 = vadd.f32 0.0, %v782
    %v784 = vpop.f32.mrf.mxu0
    %v785 = vpop.f32.mrf.mxu0
    %v786 = vadd.f32 0.0, %v785
    %v787 = vpop.f32.mrf.mxu0
    %788 = vmatprep.mubr.bf16.mxu0 %v615
    %789 = vmatmul.mubr.bf16.gmra.mxu0 %v614
    %v790 = vpop.f32.mrf.mxu0
    %v791 = vadd.f32 0.0, %v790
    %v792 = vpop.f32.mrf.mxu0
    %v793 = vpop.f32.mrf.mxu0
    %v794 = vadd.f32 0.0, %v793
    %v795 = vpop.f32.mrf.mxu0
    %796 = vmatprep.mubr.bf16.mxu0 %v617
    %797 = vmatmul.mubr.bf16.gmra.mxu0 %v616
    %v798 = vpop.f32.mrf.mxu0
    %v799 = vadd.f32 0.0, %v798
    %v800 = vpop.f32.mrf.mxu0
    %v801 = vpop.f32.mrf.mxu0
    %v802 = vadd.f32 0.0, %v801
    %v803 = vpop.f32.mrf.mxu0
    %804 = vmatprep.mubr.bf16.mxu0 %v619
    %805 = vmatmul.mubr.bf16.gmra.mxu0 %v618
    %v806 = vpop.f32.mrf.mxu0
    %v807 = vadd.f32 0.0, %v806
    %v808 = vpop.f32.mrf.mxu0
    %v809 = vpop.f32.mrf.mxu0
    %v810 = vadd.f32 0.0, %v809
    %v811 = vpop.f32.mrf.mxu0
    %812 = vdwg.mxu0
    %v813 = vadd.f32 %v412, %v687
    %v814 = vadd.f32 %v413, %v690
    %v815 = vadd.f32 %v414, %v695
    %v816 = vadd.f32 %v415, %v698
    %v817 = vadd.f32 %v416, %v703
    %v818 = vadd.f32 %v417, %v706
    %v819 = vadd.f32 %v418, %v711
    %v820 = vadd.f32 %v419, %v714
    %v821 = vadd.f32 %v420, %v719
    %v822 = vadd.f32 %v421, %v722
    %v823 = vadd.f32 %v422, %v727
    %v824 = vadd.f32 %v423, %v730
    %v825 = vadd.f32 %v424, %v735
    %v826 = vadd.f32 %v425, %v738
    %v827 = vadd.f32 %v426, %v743
    %v828 = vadd.f32 %v427, %v746
    %v829 = vadd.f32 %v428, %v751
    %v830 = vadd.f32 %v429, %v754
    %v831 = vadd.f32 %v430, %v759
    %v832 = vadd.f32 %v431, %v762
    %v833 = vadd.f32 %v432, %v767
    %v834 = vadd.f32 %v433, %v770
    %v835 = vadd.f32 %v434, %v775
    %v836 = vadd.f32 %v435, %v778
    %v837 = vadd.f32 %v436, %v783
    %v838 = vadd.f32 %v437, %v786
    %v839 = vadd.f32 %v438, %v791
    %v840 = vadd.f32 %v439, %v794
    %v841 = vadd.f32 %v440, %v799
    %v842 = vadd.f32 %v441, %v802
    %v843 = vadd.f32 %v442, %v807
    %v844 = vadd.f32 %v443, %v810
    %845 = vst [vmem:[#allocation5] sm:$0xff] %v813
    %846 = vst [vmem:[#allocation5 + $0x8] sm:$0xff] %v814
    %847 = vst [vmem:[#allocation5 + $0x10] sm:$0xff] %v815
    %848 = vst [vmem:[#allocation5 + $0x18] sm:$0xff] %v816
    %849 = vst [vmem:[#allocation5 + $0x20] sm:$0xff] %v817
    %850 = vst [vmem:[#allocation5 + $0x28] sm:$0xff] %v818
    %851 = vst [vmem:[#allocation5 + $0x30] sm:$0xff] %v819
    %852 = vst [vmem:[#allocation5 + $0x38] sm:$0xff] %v820
    %853 = vst [vmem:[#allocation5 + $0x40] sm:$0xff] %v821
    %854 = vst [vmem:[#allocation5 + $0x48] sm:$0xff] %v822
    %855 = vst [vmem:[#allocation5 + $0x50] sm:$0xff] %v823
    %856 = vst [vmem:[#allocation5 + $0x58] sm:$0xff] %v824
    %857 = vst [vmem:[#allocation5 + $0x60] sm:$0xff] %v825
    %858 = vst [vmem:[#allocation5 + $0x68] sm:$0xff] %v826
    %859 = vst [vmem:[#allocation5 + $0x70] sm:$0xff] %v827
    %860 = vst [vmem:[#allocation5 + $0x78] sm:$0xff] %v828
    %861 = vst [vmem:[#allocation5 + $0x80] sm:$0xff] %v829
    %862 = vst [vmem:[#allocation5 + $0x88] sm:$0xff] %v830
    %863 = vst [vmem:[#allocation5 + $0x90] sm:$0xff] %v831
    %864 = vst [vmem:[#allocation5 + $0x98] sm:$0xff] %v832
    %865 = vst [vmem:[#allocation5 + $0xa0] sm:$0xff] %v833
    %866 = vst [vmem:[#allocation5 + $0xa8] sm:$0xff] %v834
    %867 = vst [vmem:[#allocation5 + $0xb0] sm:$0xff] %v835
    %868 = vst [vmem:[#allocation5 + $0xb8] sm:$0xff] %v836
    %869 = vst [vmem:[#allocation5 + $0xc0] sm:$0xff] %v837
    %870 = vst [vmem:[#allocation5 + $0xc8] sm:$0xff] %v838
    %871 = vst [vmem:[#allocation5 + $0xd0] sm:$0xff] %v839
    %872 = vst [vmem:[#allocation5 + $0xd8] sm:$0xff] %v840
    %873 = vst [vmem:[#allocation5 + $0xe0] sm:$0xff] %v841
    %874 = vst [vmem:[#allocation5 + $0xe8] sm:$0xff] %v842
    %875 = vst [vmem:[#allocation5 + $0xf0] sm:$0xff] %v843
    %876 = vst [vmem:[#allocation5 + $0xf8] sm:$0xff] %v844
    // Predicated region
    $region26: #{tpu_custom_call.1} parent=1 // pred_check
      %p877 = pneg %p33
    $region27: #{tpu_custom_call.1} parent=1 // pred_check_branch
      %879 = sbr.rel (%p877) target = $region29
    $region28: #{tpu_custom_call.1} parent=1 // pred_region
      %v880 = vld [vmem:[#allocation5] sm:$0xff]
      %v881 = vld [vmem:[#allocation5 + $0x8] sm:$0xff]
      %v882 = vld [vmem:[#allocation5 + $0x10] sm:$0xff]
      %v883 = vld [vmem:[#allocation5 + $0x18] sm:$0xff]
      %v884 = vld [vmem:[#allocation5 + $0x20] sm:$0xff]
      %v885 = vld [vmem:[#allocation5 + $0x28] sm:$0xff]
      %v886 = vld [vmem:[#allocation5 + $0x30] sm:$0xff]
      %v887 = vld [vmem:[#allocation5 + $0x38] sm:$0xff]
      %v888 = vld [vmem:[#allocation5 + $0x40] sm:$0xff]
      %v889 = vld [vmem:[#allocation5 + $0x48] sm:$0xff]
      %v890 = vld [vmem:[#allocation5 + $0x50] sm:$0xff]
      %v891 = vld [vmem:[#allocation5 + $0x58] sm:$0xff]
      %v892 = vld [vmem:[#allocation5 + $0x60] sm:$0xff]
      %v893 = vld [vmem:[#allocation5 + $0x68] sm:$0xff]
      %v894 = vld [vmem:[#allocation5 + $0x70] sm:$0xff]
      %v895 = vld [vmem:[#allocation5 + $0x78] sm:$0xff]
      %v896 = vld [vmem:[#allocation5 + $0x80] sm:$0xff]
      %v897 = vld [vmem:[#allocation5 + $0x88] sm:$0xff]
      %v898 = vld [vmem:[#allocation5 + $0x90] sm:$0xff]
      %v899 = vld [vmem:[#allocation5 + $0x98] sm:$0xff]
      %v900 = vld [vmem:[#allocation5 + $0xa0] sm:$0xff]
      %v901 = vld [vmem:[#allocation5 + $0xa8] sm:$0xff]
      %v902 = vld [vmem:[#allocation5 + $0xb0] sm:$0xff]
      %v903 = vld [vmem:[#allocation5 + $0xb8] sm:$0xff]
      %v904 = vld [vmem:[#allocation5 + $0xc0] sm:$0xff]
      %v905 = vld [vmem:[#allocation5 + $0xc8] sm:$0xff]
      %v906 = vld [vmem:[#allocation5 + $0xd0] sm:$0xff]
      %v907 = vld [vmem:[#allocation5 + $0xd8] sm:$0xff]
      %v908 = vld [vmem:[#allocation5 + $0xe0] sm:$0xff]
      %v909 = vld [vmem:[#allocation5 + $0xe8] sm:$0xff]
      %v910 = vld [vmem:[#allocation5 + $0xf0] sm:$0xff]
      %v911 = vld [vmem:[#allocation5 + $0xf8] sm:$0xff]
      %v912 = vld [vmem:[%s3] sm:$0x1]
      %v914 = vlaneseq
      %v915 = vshrl.u32 %v914, 7
      %v916 = vsub.s32 0, %v915
      %v917 = vrot.slane %v912, %v916
      %v919 = vadd.f32 %v880, %v917
      %v920 = vadd.f32 %v881, %v917
      %v921 = vadd.f32 %v882, %v917
      %v922 = vadd.f32 %v883, %v917
      %v923 = vadd.f32 %v884, %v917
      %v924 = vadd.f32 %v885, %v917
      %v925 = vadd.f32 %v886, %v917
      %v926 = vadd.f32 %v887, %v917
      %v927 = vadd.f32 %v888, %v917
      %v928 = vadd.f32 %v889, %v917
      %v929 = vadd.f32 %v890, %v917
      %v930 = vadd.f32 %v891, %v917
      %v931 = vadd.f32 %v892, %v917
      %v932 = vadd.f32 %v893, %v917
      %v933 = vadd.f32 %v894, %v917
      %v934 = vadd.f32 %v895, %v917
      %v935 = vadd.f32 %v896, %v917
      %v936 = vadd.f32 %v897, %v917
      %v937 = vadd.f32 %v898, %v917
      %v938 = vadd.f32 %v899, %v917
      %v939 = vadd.f32 %v900, %v917
      %v940 = vadd.f32 %v901, %v917
      %v941 = vadd.f32 %v902, %v917
      %v942 = vadd.f32 %v903, %v917
      %v943 = vadd.f32 %v904, %v917
      %v944 = vadd.f32 %v905, %v917
      %v945 = vadd.f32 %v906, %v917
      %v946 = vadd.f32 %v907, %v917
      %v947 = vadd.f32 %v908, %v917
      %v948 = vadd.f32 %v909, %v917
      %v949 = vadd.f32 %v910, %v917
      %v950 = vadd.f32 %v911, %v917
      %v951 = vmax.f32 %v919, 0.0
      %v952 = vmax.f32 %v920, 0.0
      %v953 = vmax.f32 %v921, 0.0
      %v954 = vmax.f32 %v922, 0.0
      %v955 = vmax.f32 %v923, 0.0
      %v956 = vmax.f32 %v924, 0.0
      %v957 = vmax.f32 %v925, 0.0
      %v958 = vmax.f32 %v926, 0.0
      %v959 = vmax.f32 %v927, 0.0
      %v960 = vmax.f32 %v928, 0.0
      %v961 = vmax.f32 %v929, 0.0
      %v962 = vmax.f32 %v930, 0.0
      %v963 = vmax.f32 %v931, 0.0
      %v964 = vmax.f32 %v932, 0.0
      %v965 = vmax.f32 %v933, 0.0
      %v966 = vmax.f32 %v934, 0.0
      %v967 = vmax.f32 %v935, 0.0
      %v968 = vmax.f32 %v936, 0.0
      %v969 = vmax.f32 %v937, 0.0
      %v970 = vmax.f32 %v938, 0.0
      %v971 = vmax.f32 %v939, 0.0
      %v972 = vmax.f32 %v940, 0.0
      %v973 = vmax.f32 %v941, 0.0
      %v974 = vmax.f32 %v942, 0.0
      %v975 = vmax.f32 %v943, 0.0
      %v976 = vmax.f32 %v944, 0.0
      %v977 = vmax.f32 %v945, 0.0
      %v978 = vmax.f32 %v946, 0.0
      %v979 = vmax.f32 %v947, 0.0
      %v980 = vmax.f32 %v948, 0.0
      %v981 = vmax.f32 %v949, 0.0
      %v982 = vmax.f32 %v950, 0.0
      %983 = vst [vmem:[#allocation5] sm:$0xff] %v951
      %984 = vst [vmem:[#allocation5 + $0x8] sm:$0xff] %v952
      %985 = vst [vmem:[#allocation5 + $0x10] sm:$0xff] %v953
      %986 = vst [vmem:[#allocation5 + $0x18] sm:$0xff] %v954
      %987 = vst [vmem:[#allocation5 + $0x20] sm:$0xff] %v955
      %988 = vst [vmem:[#allocation5 + $0x28] sm:$0xff] %v956
      %989 = vst [vmem:[#allocation5 + $0x30] sm:$0xff] %v957
      %990 = vst [vmem:[#allocation5 + $0x38] sm:$0xff] %v958
      %991 = vst [vmem:[#allocation5 + $0x40] sm:$0xff] %v959
      %992 = vst [vmem:[#allocation5 + $0x48] sm:$0xff] %v960
      %993 = vst [vmem:[#allocation5 + $0x50] sm:$0xff] %v961
      %994 = vst [vmem:[#allocation5 + $0x58] sm:$0xff] %v962
      %995 = vst [vmem:[#allocation5 + $0x60] sm:$0xff] %v963
      %996 = vst [vmem:[#allocation5 + $0x68] sm:$0xff] %v964
      %997 = vst [vmem:[#allocation5 + $0x70] sm:$0xff] %v965
      %998 = vst [vmem:[#allocation5 + $0x78] sm:$0xff] %v966
      %999 = vst [vmem:[#allocation5 + $0x80] sm:$0xff] %v967
      %1000 = vst [vmem:[#allocation5 + $0x88] sm:$0xff] %v968
      %1001 = vst [vmem:[#allocation5 + $0x90] sm:$0xff] %v969
      %1002 = vst [vmem:[#allocation5 + $0x98] sm:$0xff] %v970
      %1003 = vst [vmem:[#allocation5 + $0xa0] sm:$0xff] %v971
      %1004 = vst [vmem:[#allocation5 + $0xa8] sm:$0xff] %v972
      %1005 = vst [vmem:[#allocation5 + $0xb0] sm:$0xff] %v973
      %1006 = vst [vmem:[#allocation5 + $0xb8] sm:$0xff] %v974
      %1007 = vst [vmem:[#allocation5 + $0xc0] sm:$0xff] %v975
      %1008 = vst [vmem:[#allocation5 + $0xc8] sm:$0xff] %v976
      %1009 = vst [vmem:[#allocation5 + $0xd0] sm:$0xff] %v977
      %1010 = vst [vmem:[#allocation5 + $0xd8] sm:$0xff] %v978
      %1011 = vst [vmem:[#allocation5 + $0xe0] sm:$0xff] %v979
      %1012 = vst [vmem:[#allocation5 + $0xe8] sm:$0xff] %v980
      %1013 = vst [vmem:[#allocation5 + $0xf0] sm:$0xff] %v981
      %1014 = vst [vmem:[#allocation5 + $0xf8] sm:$0xff] %v982
    $region29: #{tpu_custom_call.1} parent=1 // pred_fallthru
      _
    // Predicated region
    $region30: #{tpu_custom_call.1} parent=1 // pred_check
      _
    $region31: #{tpu_custom_call.1} parent=1 // pred_check_branch
      %1016 = sbr.rel (0) target = $region33
    $region32: #{tpu_custom_call.1} parent=1 // pred_region
      %s1018 = ssub.s32 4096, 4096
      %1019 = vsyncadd [#allocation4], %s1018
      %s1020 = sshll.u32 [#allocation5], 4
      %s1021 = int_to_ptr.vmem [resolvable:$true] %s1020
      %1026 = dma.vmem_to_hbm [thread:$0]  %s1021, 4096, %s4, [#allocation4], 128, 128, 8
    $region33: #{tpu_custom_call.1} parent=1 // pred_fallthru
      _
    // Predicated region
    $region34: #{tpu_custom_call.1} parent=1 // pred_check
      _
    $region35: #{tpu_custom_call.1} parent=1 // pred_check_branch
      %1028 = sbr.rel (0) target = $region37
    $region36: #{tpu_custom_call.1} parent=1 // pred_region
      %1029 = dma.done [#allocation4], 4096
    $region37: #{tpu_custom_call.1} parent=1 // pred_fallthru
      _
    %1030 = vsyncpa [#allocation3], 1
    %1031 = vsyncpa [#allocation4], 1

</llo_original>
